<compile_context>
chip_gen: v7x
topology: tpu7x:2x2x1
jax: 0.10.0
libtpu: 0.0.40
codegen_flags: <defaults>
</compile_context>

<pallas_src>
import functools

import jax
import jax.numpy as jnp
from jax import lax
from jax.experimental import pallas as pl
from jax.experimental.pallas import tpu as pltpu


def _round_up(x: int, m: int) -> int:
    return ((x + m - 1) // m) * m


def _gat_agg_kernel(h_ref, adj_ref, out_ref, *, tile: int, h_resident: bool):
    """One (dst-tile i, src-tile k) grid step of   out = adj^T @ H.

    adj_ref : (t, t)       int8 tile of adj[src, dst]
    h_ref   : (t, fp) bf16 tile of H = feat @ W  (or the whole padded H if resident)
    out_ref : (t, fp) f32  output block, VMEM-resident across the k reduction
    """
    k = pl.program_id(1)

    @pl.when(k == 0)
    def _init():
        out_ref[...] = jnp.zeros_like(out_ref)

    if h_resident:
        # Whole H lives in VMEM (fetched once); take the k-th src slab.
        start = pl.multiple_of(k * tile, tile)
        h = h_ref[pl.ds(start, tile), :]
    else:
        h = h_ref[...]

    # int8 {0,1} -> bf16 on the VPU (via f32: both converts lower natively and
    # fuse in-register).  The MXU then runs a native bf16 x bf16 matmul.
    adj = adj_ref[...].astype(jnp.float32).astype(jnp.bfloat16)

    # Contract over the src (first) axis of both operands -> (dst_tile, fp).
    # No explicit .T: Mosaic handles the transposed-LHS matmul itself, so no
    # per-step XLU transpose and no large f32 temporary.
    out_ref[...] += lax.dot_general(
        adj, h,
        dimension_numbers=(((0,), (0,)), ((), ())),
        preferred_element_type=jnp.float32,
    )


def gat_layer(feat, W, al, ar, adj, *, tile: int = 1024,
              resident_h_bytes: int = 2 * 1024 * 1024):
    """rst = adj^T @ (feat @ W), tiled over (dst, src) with in-place f32 accumulation.

    adj is (N, N) with adj[src, dst] = 1.0 iff there is an edge src -> dst.
    al / ar are accepted for parity with the torch module but are provably dead
    under its literal forward (per-edge softmax over a singleton axis == 1.0).
    """
    del al, ar  # dead parameters under the literal forward semantics (see header)

    N, _ = feat.shape
    out_feats = W.shape[1]

    # Lane-dense output: pad Fout to a multiple of 128 so stores are full-width
    # vst instead of masked partial stores; extra columns are sliced off below.
    fp = _round_up(out_feats, 128)

    # H = feat @ W once (tiny K=8 matmul -> leave it to XLA), pad, cast to bf16.
    h = feat.astype(jnp.float32) @ W.astype(jnp.float32)          # (N, out_feats)
    h = jnp.pad(h, ((0, 0), (0, fp - out_feats)))

    t = _round_up(min(tile, _round_up(N, 128)), 128)
    n_pad = _round_up(N, t)

    h_p = jnp.pad(h, ((0, n_pad - N), (0, 0))).astype(jnp.bfloat16)

    # 0/1 adjacency -> int8 storage: 1 byte / element HBM stream (lossless).
    # NOTE: in a real model build this int8 adjacency once at graph-construction
    # time and reuse it across layers / steps.
    # TODO(synk): for realistically sparse graphs, replace this dense N^2 stream
    # with a CSR / scalar-prefetch gather formulation.
    adj_p = jnp.pad(adj, ((0, n_pad - N), (0, n_pad - N))).astype(jnp.int8)

    n_tiles = n_pad // t
    grid = (n_tiles, n_tiles)   # (dst [parallel, megacore-shardable], src [reduction, last])

    # Keep the whole H VMEM-resident when small (fetched once); else stream per src tile.
    h_resident = (n_pad * fp * 2) <= resident_h_bytes
    if h_resident:
        h_spec = pl.BlockSpec((n_pad, fp), lambda i, k: (0, 0))
    else:
        h_spec = pl.BlockSpec((t, fp), lambda i, k: (k, 0))

    kernel = functools.partial(_gat_agg_kernel, tile=t, h_resident=h_resident)

    out = pl.pallas_call(
        kernel,
        out_shape=jax.ShapeDtypeStruct((n_pad, fp), jnp.float32),
        grid_spec=pltpu.PrefetchScalarGridSpec(
            num_scalar_prefetch=0,
            grid=grid,
            in_specs=[
                h_spec,                                          # H = feat @ W (bf16)
                pl.BlockSpec((t, t), lambda i, k: (k, i)),       # adj[src, dst] int8 tile
            ],
            # Constant over k -> VMEM-resident accumulator; no scratch needed.
            out_specs=pl.BlockSpec((t, fp), lambda i, k: (i, 0)),
        ),
        compiler_params=pltpu.CompilerParams(
            dimension_semantics=("parallel", "arbitrary")),
    )(h_p, adj_p)

    return out[:N, :out_feats]


def gat_layer_ref(feat, W, al, ar, adj):
    """Pure-JAX reference of the literal torch/DGL forward semantics."""
    h = feat @ W
    el = feat @ al                       # (N, 1)
    er = feat @ ar                       # (N, 1)
    e = el + er.T                        # e[src, dst]
    e = jnp.where(e > 0, e, 0.01 * e)    # leaky_relu (torch default slope 0.01)
    w = jnp.ones_like(e)                 # F.softmax over the singleton per-edge axis
    return (adj * w).T @ h


def _make_inputs(key, n, in_feats, out_feats):
    k_feat, k_w, k_al, k_ar, k_adj = jax.random.split(key, 5)
    feat = jax.random.normal(k_feat, (n, in_feats), dtype=jnp.float32)
    W = jax.random.normal(k_w, (in_feats, out_feats), dtype=jnp.float32)
    al = jax.random.normal(k_al, (in_feats, 1), dtype=jnp.float32)
    ar = jax.random.normal(k_ar, (in_feats, 1), dtype=jnp.float32)
    adj = (jax.random.uniform(k_adj, (n, n)) < 0.4).astype(jnp.float32)
    adj = jnp.maximum(adj, jnp.eye(n, dtype=jnp.float32))    # self loops
    return feat, W, al, ar, adj


def _rel_err(a, b):
    return float(jnp.max(jnp.abs(a - b)) / (jnp.max(jnp.abs(b)) + 1e-6))


if __name__ == "__main__":
    key = jax.random.PRNGKey(0)
    k_small, k_mid = jax.random.split(key, 2)

    # Small shapes consistent with the module.
    n, in_feats, out_feats = 16, 8, 32
    feat, W, al, ar, adj = _make_inputs(k_small, n, in_feats, out_feats)
    out = jax.block_until_ready(gat_layer(feat, W, al, ar, adj))
    ref = gat_layer_ref(feat, W, al, ar, adj)
    assert out.shape == (n, out_feats)
    assert _rel_err(out, ref) < 1e-2, "small-N mismatch vs reference"

    # Medium graph with a small tile: exercises the multi-tile (dst, src) grid,
    # in-place reduction accumulation, and the row/column padding path.
    n_mid = 700
    feat2, W2, al2, ar2, adj2 = _make_inputs(k_mid, n_mid, in_feats, out_feats)
    ref2 = gat_layer_ref(feat2, W2, al2, ar2, adj2)

    out2 = jax.block_until_ready(gat_layer(feat2, W2, al2, ar2, adj2, tile=256))
    assert out2.shape == (n_mid, out_feats)
    assert _rel_err(out2, ref2) < 1e-2, "medium-N (resident H) mismatch vs reference"

    # Same graph, forcing the streamed-H (non-resident) BlockSpec path.
    out3 = jax.block_until_ready(
        gat_layer(feat2, W2, al2, ar2, adj2, tile=256, resident_h_bytes=0))
    assert _rel_err(out3, ref2) < 1e-2, "medium-N (streamed H) mismatch vs reference"

    print("KERNEL_OK")
</pallas_src>

<mosaic_0001>
module attributes {stable_mosaic.version = 11 : i64} {
  func.func @_gat_agg_kernel(%arg0: i32, %arg1: i32, %arg2: memref<128x128xbf16, #tpu.memory_space<vmem>>, %arg3: memref<128x128xi8, #tpu.memory_space<vmem>>, %arg4: memref<128x128xf32, #tpu.memory_space<vmem>>) attributes {dimension_semantics = [#tpu.dimension_semantics<parallel>, #tpu.dimension_semantics<arbitrary>], iteration_bounds = array<i64: 1, 1>, scalar_prefetch = 0 : i64, scratch_operands = 0 : i64, tpu.core_type = #tpu.core_type<tc>, window_params = [{pipeline_mode = #tpu.pipeline_mode<synchronous>, transform_indices = @transform_0, window_bounds = array<i64: 128, 128>}, {transform_indices = @transform_1, window_bounds = array<i64: 128, 128>}, {transform_indices = @transform_2, window_bounds = array<i64: 128, 128>}]} {
    %c0_i32 = arith.constant 0 : i32
    %0 = arith.cmpi eq, %arg1, %c0_i32 : i32
    %1 = arith.extui %0 : i1 to i32
    %c0_i32_0 = arith.constant 0 : i32
    %2 = arith.cmpi ne, %1, %c0_i32_0 : i32
    scf.if %2 {
      %cst_7 = arith.constant 0.000000e+00 : f32
      %14 = vector.broadcast %cst_7 : f32 to vector<128x128xf32>
      %c0_8 = arith.constant 0 : index
      %c0_9 = arith.constant 0 : index
      %15 = vector.load %arg4[%c0_8, %c0_9] : memref<128x128xf32, #tpu.memory_space<vmem>>, vector<128x128xf32>
      tpu.vector_store %arg4[%c0_8, %c0_9], %14 {strides = array<i32>} : memref<128x128xf32, #tpu.memory_space<vmem>>, vector<128x128xf32>,
    } else {
    }
    %c128_i32 = arith.constant 128 : i32
    %3 = arith.muli %arg1, %c128_i32 : i32
    %4 = tpu.assume_multiple %3, 128 : i32
    %5 = arith.index_cast %4 : i32 to index
    %c0 = arith.constant 0 : index
    %6 = vector.load %arg2[%5, %c0] : memref<128x128xbf16, #tpu.memory_space<vmem>>, vector<128x128xbf16>
    %c0_1 = arith.constant 0 : index
    %c0_2 = arith.constant 0 : index
    %7 = vector.load %arg3[%c0_1, %c0_2] : memref<128x128xi8, #tpu.memory_space<vmem>>, vector<128x128xi8>
    %8 = arith.sitofp %7 : vector<128x128xi8> to vector<128x128xf32>
    %9 = arith.truncf %8 : vector<128x128xf32> to vector<128x128xbf16>
    %c0_3 = arith.constant 0 : index
    %c0_4 = arith.constant 0 : index
    %10 = vector.load %arg4[%c0_3, %c0_4] : memref<128x128xf32, #tpu.memory_space<vmem>>, vector<128x128xf32>
    %cst = arith.constant dense<0.000000e+00> : vector<128x128xf32>
    %11 = tpu.matmul %9, %6, %cst {dimension_numbers = #tpu.dot_dimension_numbers<[0], [0], [1], [1], [0, 1, 1, 1], [], []>} : vector<128x128xbf16>, vector<128x128xbf16>, vector<128x128xf32> -> vector<128x128xf32>
    %12 = arith.addf %10, %11 : vector<128x128xf32>
    %c0_5 = arith.constant 0 : index
    %c0_6 = arith.constant 0 : index
    %13 = vector.load %arg4[%c0_5, %c0_6] : memref<128x128xf32, #tpu.memory_space<vmem>>, vector<128x128xf32>
    tpu.vector_store %arg4[%c0_5, %c0_6], %12 {strides = array<i32>} : memref<128x128xf32, #tpu.memory_space<vmem>>, vector<128x128xf32>,
    return
  }
  func.func @transform_0(%arg0: i32, %arg1: i32) -> (i32, i32) {
    %c0_i32 = arith.constant 0 : i32
    %c0_i32_0 = arith.constant 0 : i32
    %c0_i32_1 = arith.constant 0 : i32
    return %c0_i32, %c0_i32_0 : i32, i32
  }
  func.func @transform_1(%arg0: i32, %arg1: i32) -> (i32, i32) {
    %c0_i32 = arith.constant 0 : i32
    return %arg1, %arg0 : i32, i32
  }
  func.func @transform_2(%arg0: i32, %arg1: i32) -> (i32, i32) {
    %c0_i32 = arith.constant 0 : i32
    %c0_i32_0 = arith.constant 0 : i32
    return %arg0, %c0_i32 : i32, i32
  }
}

</mosaic_0001>

<llo_original>
// kernel: tpu_custom_call.1
$region0: #{tpu_custom_call.1}
  #allocation0 [shape = 'u32[]', space=smem, size = 0x4, offset = 0x4, fixed_abs, tag = 'smem constant byte address 0x4 - core index']
  #allocation1 [shape = 'u32[144,128]{1,0:T(1,128)}', space=vmem, size = 0x12000, scoped, tag = 'internal scratch']
  %s0 = inlined_call_operand.hbm [shape: bf16[128,128], index: 0, kind: input, shape index: {}]
  %s1 = inlined_call_operand.hbm [shape: s8[128,128], index: 1, kind: input, shape index: {}]
  %s2 = inlined_call_operand.hbm [shape: f32[128,128], index: 2, kind: output, shape index: {}]
  %s3 = sld [smem:[#allocation0]]
  $region30: #{tpu_custom_call.1} parent=0
    _
  %s5 = ssub.s32 1, %s3
  %s6 = scalar_select 0, %s5, %s3
  $region1: #{tpu_custom_call.1} parent=0
    #allocation2 [shape = 'u8[32768]{0}', space=vmem, size = 0x8000, scoped, tag = 'input window, operand 0, single buffered']
    #allocation3 [shape = 's32[1]{0}', space=sflag, size = 0x4, scoped, tag = 'scoped memory for tpu_custom_call.1']
    #allocation4 [shape = 's32[1]{0}', space=sflag, size = 0x4, scoped, tag = 'scoped memory for tpu_custom_call.1']
    #allocation5 [shape = 'u8[16384]{0}', space=vmem, size = 0x4000, scoped, tag = 'input window, operand 1, single buffered']
    #allocation6 [shape = 's32[1]{0}', space=sflag, size = 0x4, scoped, tag = 'scoped memory for tpu_custom_call.1']
    #allocation7 [shape = 'u8[65536]{0}', space=vmem, size = 0x10000, scoped, tag = 'output window, operand 0, single buffered']
    %7 = vsyncpa [#allocation3], 0
    %8 = vsyncpa [#allocation6], 0
    %9 = vsyncpa [#allocation4], 0
    // Predicated region
    $region2: #{tpu_custom_call.1} parent=1 // pred_check
      _
    $region3: #{tpu_custom_call.1} parent=1 // pred_check_branch
      %11 = sbr.rel (0) target = $region5
    $region4: #{tpu_custom_call.1} parent=1 // pred_region
      %s13 = ssub.s32 1024, 1024
      %14 = vsyncadd [#allocation3], %s13
      %s15 = sshll.u32 [#allocation2], 4
      %s16 = int_to_ptr.vmem [resolvable:$true] %s15
      %21 = dma.hbm_to_vmem [thread:$0]  %s0, 1024, %s16, [#allocation3], 64, 64, 4
    $region5: #{tpu_custom_call.1} parent=1 // pred_fallthru
      _
    // Predicated region
    $region6: #{tpu_custom_call.1} parent=1 // pred_check
      _
    $region7: #{tpu_custom_call.1} parent=1 // pred_check_branch
      %23 = sbr.rel (0) target = $region9
    $region8: #{tpu_custom_call.1} parent=1 // pred_region
      %s25 = ssub.s32 512, 512
      %26 = vsyncadd [#allocation6], %s25
      %s27 = sshll.u32 [#allocation5], 4
      %s28 = int_to_ptr.vmem [resolvable:$true] %s27
      %33 = dma.hbm_to_vmem [thread:$0]  %s1, 512, %s28, [#allocation6], 128, 128, 8
    $region9: #{tpu_custom_call.1} parent=1 // pred_fallthru
      _
    // Predicated region
    $region10: #{tpu_custom_call.1} parent=1 // pred_check
      _
    $region11: #{tpu_custom_call.1} parent=1 // pred_check_branch
      %35 = sbr.rel (0) target = $region13
    $region12: #{tpu_custom_call.1} parent=1 // pred_region
      %36 = dma.done [#allocation3], 1024
    $region13: #{tpu_custom_call.1} parent=1 // pred_fallthru
      _
    // Predicated region
    $region14: #{tpu_custom_call.1} parent=1 // pred_check
      _
    $region15: #{tpu_custom_call.1} parent=1 // pred_check_branch
      %38 = sbr.rel (0) target = $region17
    $region16: #{tpu_custom_call.1} parent=1 // pred_region
      %39 = dma.done [#allocation6], 512
    $region17: #{tpu_custom_call.1} parent=1 // pred_fallthru
      _
    %p41 = scmp.eq.s32.totalorder 0, 0
    // Predicated region
    $region18: #{tpu_custom_call.1} parent=1 // pred_check
      %p42 = pneg %p41
    $region19: #{tpu_custom_call.1} parent=1 // pred_check_branch
      %44 = sbr.rel (%p42) target = $region21
    $region20: #{tpu_custom_call.1} parent=1 // pred_region
      %45 = vst [vmem:[#allocation7] sm:$0xff] 0.0
      %46 = vst [vmem:[#allocation7 + $0x8] sm:$0xff] 0.0
      %47 = vst [vmem:[#allocation7 + $0x10] sm:$0xff] 0.0
      %48 = vst [vmem:[#allocation7 + $0x18] sm:$0xff] 0.0
      %49 = vst [vmem:[#allocation7 + $0x20] sm:$0xff] 0.0
      %50 = vst [vmem:[#allocation7 + $0x28] sm:$0xff] 0.0
      %51 = vst [vmem:[#allocation7 + $0x30] sm:$0xff] 0.0
      %52 = vst [vmem:[#allocation7 + $0x38] sm:$0xff] 0.0
      %53 = vst [vmem:[#allocation7 + $0x40] sm:$0xff] 0.0
      %54 = vst [vmem:[#allocation7 + $0x48] sm:$0xff] 0.0
      %55 = vst [vmem:[#allocation7 + $0x50] sm:$0xff] 0.0
      %56 = vst [vmem:[#allocation7 + $0x58] sm:$0xff] 0.0
      %57 = vst [vmem:[#allocation7 + $0x60] sm:$0xff] 0.0
      %58 = vst [vmem:[#allocation7 + $0x68] sm:$0xff] 0.0
      %59 = vst [vmem:[#allocation7 + $0x70] sm:$0xff] 0.0
      %60 = vst [vmem:[#allocation7 + $0x78] sm:$0xff] 0.0
    $region21: #{tpu_custom_call.1} parent=1 // pred_fallthru
      _
    %s61 = smul.u32 0, 128
    %s62 = sshra.s32 %s61, 3
    %s63 = sand.u32 %s61, 7
    %s64 = smul.addr %s62, 4
    %s65 = scalar_lea.vmem [#allocation2], %s64
    %v66 = vld [vmem:[%s65] sm:$0xf]
    %v67 = vld [vmem:[%s65 + $0x4] sm:$0xf]
    %v68 = vld [vmem:[%s65 + $0x8] sm:$0xf]
    %v69 = vld [vmem:[%s65 + $0xc] sm:$0xf]
    %v70 = vld [vmem:[%s65 + $0x10] sm:$0xf]
    %v71 = vld [vmem:[%s65 + $0x14] sm:$0xf]
    %v72 = vld [vmem:[%s65 + $0x18] sm:$0xf]
    %v73 = vld [vmem:[%s65 + $0x1c] sm:$0xf]
    %v74 = vld [vmem:[%s65 + $0x20] sm:$0xf]
    %v75 = vld [vmem:[%s65 + $0x24] sm:$0xf]
    %v76 = vld [vmem:[%s65 + $0x28] sm:$0xf]
    %v77 = vld [vmem:[%s65 + $0x2c] sm:$0xf]
    %v78 = vld [vmem:[%s65 + $0x30] sm:$0xf]
    %v79 = vld [vmem:[%s65 + $0x34] sm:$0xf]
    %v80 = vld [vmem:[%s65 + $0x38] sm:$0xf]
    %v81 = vld [vmem:[%s65 + $0x3c] sm:$0xf]
    %v82 = vld [vmem:[#allocation5] sm:$0xff]
    %v83 = vld [vmem:[#allocation5 + $0x8] sm:$0xff]
    %v84 = vld [vmem:[#allocation5 + $0x10] sm:$0xff]
    %v85 = vld [vmem:[#allocation5 + $0x18] sm:$0xff]
    %v86 = vunpack.c.l.s8.bf16 %v82
    %v87 = vunpack.c.h.s8.bf16 %v82
    %v88 = vunpack.c.l.s8.bf16 %v83
    %v89 = vunpack.c.h.s8.bf16 %v83
    %v90 = vunpack.c.l.s8.bf16 %v84
    %v91 = vunpack.c.h.s8.bf16 %v84
    %v92 = vunpack.c.l.s8.bf16 %v85
    %v93 = vunpack.c.h.s8.bf16 %v85
    %v94 = vld [vmem:[#allocation7] sm:$0xff]
    %v95 = vld [vmem:[#allocation7 + $0x8] sm:$0xff]
    %v96 = vld [vmem:[#allocation7 + $0x10] sm:$0xff]
    %v97 = vld [vmem:[#allocation7 + $0x18] sm:$0xff]
    %v98 = vld [vmem:[#allocation7 + $0x20] sm:$0xff]
    %v99 = vld [vmem:[#allocation7 + $0x28] sm:$0xff]
    %v100 = vld [vmem:[#allocation7 + $0x30] sm:$0xff]
    %v101 = vld [vmem:[#allocation7 + $0x38] sm:$0xff]
    %v102 = vld [vmem:[#allocation7 + $0x40] sm:$0xff]
    %v103 = vld [vmem:[#allocation7 + $0x48] sm:$0xff]
    %v104 = vld [vmem:[#allocation7 + $0x50] sm:$0xff]
    %v105 = vld [vmem:[#allocation7 + $0x58] sm:$0xff]
    %v106 = vld [vmem:[#allocation7 + $0x60] sm:$0xff]
    %v107 = vld [vmem:[#allocation7 + $0x68] sm:$0xff]
    %v108 = vld [vmem:[#allocation7 + $0x70] sm:$0xff]
    %v109 = vld [vmem:[#allocation7 + $0x78] sm:$0xff]
    %110 = vxpose.xlu0.c.b16.start [1/8] %v86, 128
    %111 = vxpose.xlu0.c.b16.cont [2/8] %v87, 128
    %112 = vxpose.xlu0.c.b16.cont [3/8] %v88, 128
    %113 = vxpose.xlu0.c.b16.cont [4/8] %v89, 128
    %114 = vxpose.xlu0.c.b16.cont [5/8] %v90, 128
    %115 = vxpose.xlu0.c.b16.cont [6/8] %v91, 128
    %116 = vxpose.xlu0.c.b16.cont [7/8] %v92, 128
    %117 = vxpose.xlu0.c.b16.end [8/8] %v93, 128
    %v118 = vpop.trf.xlu0
    %v119 = vpop.trf.xlu0
    %v120 = vpop.trf.xlu0
    %v121 = vpop.trf.xlu0
    %v122 = vpop.trf.xlu0
    %v123 = vpop.trf.xlu0
    %v124 = vpop.trf.xlu0
    %v125 = vpop.trf.xlu0
    %v142 = vunpack.c.l.b16 %v66
    %v143 = vunpack.c.l.b16 %v67
    %v144 = vunpack.c.l.b16 %v68
    %v145 = vunpack.c.l.b16 %v69
    %v146 = vunpack.c.l.b16 %v70
    %v147 = vunpack.c.l.b16 %v71
    %v148 = vunpack.c.l.b16 %v72
    %v149 = vunpack.c.l.b16 %v73
    %v150 = vunpack.c.l.b16 %v74
    %v151 = vunpack.c.l.b16 %v75
    %v152 = vunpack.c.l.b16 %v76
    %v153 = vunpack.c.l.b16 %v77
    %v154 = vunpack.c.l.b16 %v78
    %v155 = vunpack.c.l.b16 %v79
    %v156 = vunpack.c.l.b16 %v80
    %v157 = vunpack.c.l.b16 %v81
    %v158 = vpack.c.b16 %v143, %v142
    %v159 = vpack.c.b16 %v145, %v144
    %v160 = vpack.c.b16 %v147, %v146
    %v161 = vpack.c.b16 %v149, %v148
    %v162 = vpack.c.b16 %v151, %v150
    %v163 = vpack.c.b16 %v153, %v152
    %v164 = vpack.c.b16 %v155, %v154
    %v165 = vpack.c.b16 %v157, %v156
    %174 = vmatprep.subr.bf16.mxu0 0
    %175 = vmatpush1.bf16.msra.mxu0 %v158
    %176 = vmatprep.subr.bf16.mxu0 0
    %177 = vmatpush1.bf16.msra.mxu0 %v159
    %178 = vmatprep.subr.bf16.mxu0 0
    %179 = vmatpush1.bf16.msra.mxu0 %v160
    %180 = vmatprep.subr.bf16.mxu0 0
    %181 = vmatpush1.bf16.msra.mxu0 %v161
    %182 = vmatprep.subr.bf16.mxu0 0
    %183 = vmatpush1.bf16.msra.mxu0 %v162
    %184 = vmatprep.subr.bf16.mxu0 0
    %185 = vmatpush1.bf16.msra.mxu0 %v163
    %186 = vmatprep.subr.bf16.mxu0 0
    %187 = vmatpush1.bf16.msra.mxu0 %v164
    %188 = vmatprep.subr.bf16.mxu0 0
    %189 = vmatpush1.bf16.msra.mxu0 %v165
    %190 = vmatprep.subr.bf16.mxu0 0
    %191 = vmatpush1.bf16.msra.mxu0 0
    %192 = vmatprep.subr.bf16.mxu0 0
    %193 = vmatpush1.bf16.msra.mxu0 0
    %194 = vmatprep.subr.bf16.mxu0 0
    %195 = vmatpush1.bf16.msra.mxu0 0
    %196 = vmatprep.subr.bf16.mxu0 0
    %197 = vmatpush1.bf16.msra.mxu0 0
    %198 = vmatprep.subr.bf16.mxu0 0
    %199 = vmatpush1.bf16.msra.mxu0 0
    %200 = vmatprep.subr.bf16.mxu0 0
    %201 = vmatpush1.bf16.msra.mxu0 0
    %202 = vmatprep.subr.bf16.mxu0 0
    %203 = vmatpush1.bf16.msra.mxu0 0
    %204 = vmatprep.subr.bf16.mxu0 0
    %205 = vmatpush1.bf16.msra.mxu0 0
    %206 = vmatprep.mubr.bf16.mxu0 0
    %207 = vmatmul.mubr.bf16.gmra.mrb[0].mxu0 %v118
    %v208 = vpop.f32.mrb[0].mxu0
    %v209 = vadd.f32 0.0, %v208
    %v210 = vpop.f32.mrb[0].mxu0
    %v211 = vpop.f32.mrb[0].mxu0
    %v212 = vadd.f32 0.0, %v211
    %v213 = vpop.f32.mrb[0].mxu0
    %214 = vmatprep.mubr.bf16.mxu0 0
    %215 = vmatmul.mubr.bf16.gmra.mrb[0].mxu0 %v119
    %v216 = vpop.f32.mrb[0].mxu0
    %v217 = vadd.f32 0.0, %v216
    %v218 = vpop.f32.mrb[0].mxu0
    %v219 = vpop.f32.mrb[0].mxu0
    %v220 = vadd.f32 0.0, %v219
    %v221 = vpop.f32.mrb[0].mxu0
    %222 = vmatprep.mubr.bf16.mxu0 0
    %223 = vmatmul.mubr.bf16.gmra.mrb[0].mxu0 %v120
    %v224 = vpop.f32.mrb[0].mxu0
    %v225 = vadd.f32 0.0, %v224
    %v226 = vpop.f32.mrb[0].mxu0
    %v227 = vpop.f32.mrb[0].mxu0
    %v228 = vadd.f32 0.0, %v227
    %v229 = vpop.f32.mrb[0].mxu0
    %230 = vmatprep.mubr.bf16.mxu0 0
    %231 = vmatmul.mubr.bf16.gmra.mrb[0].mxu0 %v121
    %v232 = vpop.f32.mrb[0].mxu0
    %v233 = vadd.f32 0.0, %v232
    %v234 = vpop.f32.mrb[0].mxu0
    %v235 = vpop.f32.mrb[0].mxu0
    %v236 = vadd.f32 0.0, %v235
    %v237 = vpop.f32.mrb[0].mxu0
    %238 = vmatprep.mubr.bf16.mxu0 0
    %239 = vmatmul.mubr.bf16.gmra.mrb[0].mxu0 %v122
    %v240 = vpop.f32.mrb[0].mxu0
    %v241 = vadd.f32 0.0, %v240
    %v242 = vpop.f32.mrb[0].mxu0
    %v243 = vpop.f32.mrb[0].mxu0
    %v244 = vadd.f32 0.0, %v243
    %v245 = vpop.f32.mrb[0].mxu0
    %246 = vmatprep.mubr.bf16.mxu0 0
    %247 = vmatmul.mubr.bf16.gmra.mrb[0].mxu0 %v123
    %v248 = vpop.f32.mrb[0].mxu0
    %v249 = vadd.f32 0.0, %v248
    %v250 = vpop.f32.mrb[0].mxu0
    %v251 = vpop.f32.mrb[0].mxu0
    %v252 = vadd.f32 0.0, %v251
    %v253 = vpop.f32.mrb[0].mxu0
    %254 = vmatprep.mubr.bf16.mxu0 0
    %255 = vmatmul.mubr.bf16.gmra.mrb[0].mxu0 %v124
    %v256 = vpop.f32.mrb[0].mxu0
    %v257 = vadd.f32 0.0, %v256
    %v258 = vpop.f32.mrb[0].mxu0
    %v259 = vpop.f32.mrb[0].mxu0
    %v260 = vadd.f32 0.0, %v259
    %v261 = vpop.f32.mrb[0].mxu0
    %262 = vmatprep.mubr.bf16.mxu0 0
    %263 = vmatmul.mubr.bf16.gmra.mrb[0].mxu0 %v125
    %v264 = vpop.f32.mrb[0].mxu0
    %v265 = vadd.f32 0.0, %v264
    %v266 = vpop.f32.mrb[0].mxu0
    %v267 = vpop.f32.mrb[0].mxu0
    %v268 = vadd.f32 0.0, %v267
    %v269 = vpop.f32.mrb[0].mxu0
    %270 = vdwg.mxu0
    %v271 = vadd.f32 %v94, %v209
    %v272 = vadd.f32 %v95, %v212
    %v273 = vadd.f32 %v96, %v217
    %v274 = vadd.f32 %v97, %v220
    %v275 = vadd.f32 %v98, %v225
    %v276 = vadd.f32 %v99, %v228
    %v277 = vadd.f32 %v100, %v233
    %v278 = vadd.f32 %v101, %v236
    %v279 = vadd.f32 %v102, %v241
    %v280 = vadd.f32 %v103, %v244
    %v281 = vadd.f32 %v104, %v249
    %v282 = vadd.f32 %v105, %v252
    %v283 = vadd.f32 %v106, %v257
    %v284 = vadd.f32 %v107, %v260
    %v285 = vadd.f32 %v108, %v265
    %v286 = vadd.f32 %v109, %v268
    %287 = vst [vmem:[#allocation7] sm:$0xff] %v271
    %288 = vst [vmem:[#allocation7 + $0x8] sm:$0xff] %v272
    %289 = vst [vmem:[#allocation7 + $0x10] sm:$0xff] %v273
    %290 = vst [vmem:[#allocation7 + $0x18] sm:$0xff] %v274
    %291 = vst [vmem:[#allocation7 + $0x20] sm:$0xff] %v275
    %292 = vst [vmem:[#allocation7 + $0x28] sm:$0xff] %v276
    %293 = vst [vmem:[#allocation7 + $0x30] sm:$0xff] %v277
    %294 = vst [vmem:[#allocation7 + $0x38] sm:$0xff] %v278
    %295 = vst [vmem:[#allocation7 + $0x40] sm:$0xff] %v279
    %296 = vst [vmem:[#allocation7 + $0x48] sm:$0xff] %v280
    %297 = vst [vmem:[#allocation7 + $0x50] sm:$0xff] %v281
    %298 = vst [vmem:[#allocation7 + $0x58] sm:$0xff] %v282
    %299 = vst [vmem:[#allocation7 + $0x60] sm:$0xff] %v283
    %300 = vst [vmem:[#allocation7 + $0x68] sm:$0xff] %v284
    %301 = vst [vmem:[#allocation7 + $0x70] sm:$0xff] %v285
    %302 = vst [vmem:[#allocation7 + $0x78] sm:$0xff] %v286
    // Predicated region
    $region22: #{tpu_custom_call.1} parent=1 // pred_check
      _
    $region23: #{tpu_custom_call.1} parent=1 // pred_check_branch
      %304 = sbr.rel (0) target = $region25
    $region24: #{tpu_custom_call.1} parent=1 // pred_region
      %s306 = ssub.s32 2048, 2048
      %307 = vsyncadd [#allocation4], %s306
      %s308 = sshll.u32 [#allocation7], 4
      %s309 = int_to_ptr.vmem [resolvable:$true] %s308
      %314 = dma.vmem_to_hbm [thread:$0]  %s309, 2048, %s2, [#allocation4], 128, 128, 8
    $region25: #{tpu_custom_call.1} parent=1 // pred_fallthru
      _
    // Predicated region
    $region26: #{tpu_custom_call.1} parent=1 // pred_check
      _
    $region27: #{tpu_custom_call.1} parent=1 // pred_check_branch
      %316 = sbr.rel (0) target = $region29
    $region28: #{tpu_custom_call.1} parent=1 // pred_region
      %317 = dma.done [#allocation4], 2048
    $region29: #{tpu_custom_call.1} parent=1 // pred_fallthru
      _
    %318 = vsyncpa [#allocation3], 1
    %319 = vsyncpa [#allocation6], 1
    %320 = vsyncpa [#allocation4], 1

</llo_original>
